<compile_context>
chip_gen: v7x
topology: tpu7x:2x2x1
jax: 0.10.0
libtpu: 0.0.40
codegen_flags: <defaults>
</compile_context>

<pallas_src>
from functools import partial

import jax
import jax.numpy as jnp
from jax.experimental import pallas as pl
from jax.experimental.pallas import tpu as pltpu


def mhsa_kernel(x_ref, wqkv_ref, bqkv_ref, wo_ref, bo_ref, out_ref,
                *, num_heads, head_dim, matmul_dtype):
    x = x_ref[0]                                                      # [S, D]

    # Fused Q/K/V projection: one wide MXU matmul, f32 accumulation.
    qkv = (jnp.dot(x.astype(matmul_dtype), wqkv_ref[...].astype(matmul_dtype),
                   preferred_element_type=jnp.float32)
           + bqkv_ref[...])                                           # [S, 3*H*D]

    hd = num_heads * head_dim
    head_outs = []
    # Static (unrolled) loop over heads; all slicing is on values with static
    # offsets, no per-head DMA or grid step.
    for h in range(num_heads):
        q = qkv[:, h * head_dim:(h + 1) * head_dim]                   # already /D^2
        k = qkv[:, hd + h * head_dim: hd + (h + 1) * head_dim]
        v = qkv[:, 2 * hd + h * head_dim: 2 * hd + (h + 1) * head_dim]

        # NOTE: scale 1/hidden_dim**2 (matching the reference module, not
        # 1/sqrt(d)) was folded into the Q weights/bias in the wrapper.
        scores = jnp.dot(q, k.T, preferred_element_type=jnp.float32)  # [S, S]
        m = jnp.max(scores, axis=-1, keepdims=True)
        e = jnp.exp(scores - m)
        p = e * pl.reciprocal(jnp.sum(e, axis=-1, keepdims=True), approx=True)

        head_outs.append(jnp.dot(p, v, preferred_element_type=jnp.float32))

    heads_cat = jnp.concatenate(head_outs, axis=-1)                   # [S, H*D] lane-dense

    out = (jnp.dot(heads_cat.astype(matmul_dtype), wo_ref[...].astype(matmul_dtype),
                   preferred_element_type=jnp.float32)
           + bo_ref[...])                                             # [S, D]
    out_ref[0] = out.astype(out_ref.dtype)


def quant_mhsa(x, wq, bq, wk, bk, wv, bv, wo, bo, *, matmul_dtype=jnp.float32):
    """x: [B, S, D]; wq/wk/wv: [H, D_out, D_in] (PyTorch layout); bq/bk/bv: [H, D];
    wo: [D_out, H*D]; bo: [D_out].

    matmul_dtype: keep jnp.float32 for bit-accurate checks; set to jnp.bfloat16
    on v5e/v6e/v7x to feed the MXU at full rate (accumulation and softmax stay
    f32).  Do NOT use int8 on v7x (no integer MXU mode).
    """
    B, S, D = x.shape
    H = wq.shape[0]
    HD = H * D
    scale = 1.0 / float(D ** 2)

    # Build fused, pre-transposed QKV weights: [D_in, H*D_out] each.
    def cat_heads(w):   # [H, D_out, D_in] -> [D_in, H*D_out]
        return jnp.transpose(w, (2, 0, 1)).reshape(D, HD)

    w_qkv = jnp.concatenate(
        [cat_heads(wq) * scale, cat_heads(wk), cat_heads(wv)], axis=1)   # [D, 3*H*D]
    b_qkv = jnp.concatenate(
        [bq.reshape(1, HD) * scale, bk.reshape(1, HD), bv.reshape(1, HD)], axis=1)
    wo_t = wo.T                                                          # [H*D, D]
    bo2 = bo.reshape(1, D)

    kernel = partial(mhsa_kernel, num_heads=H, head_dim=D, matmul_dtype=matmul_dtype)

    # TODO(synk): for production ViT shapes (e.g. S=197) pad S to a multiple of 8
    # in the wrapper and mask the softmax; for v7x with B==1 also tile S so both
    # TensorCores get a parallel grid axis.
    return pl.pallas_call(
        kernel,
        out_shape=jax.ShapeDtypeStruct((B, S, D), jnp.float32),
        grid_spec=pltpu.PrefetchScalarGridSpec(
            num_scalar_prefetch=0,
            grid=(B,),
            in_specs=[
                pl.BlockSpec((1, S, D),     lambda b: (b, 0, 0)),   # x
                pl.BlockSpec((D, 3 * HD),   lambda b: (0, 0)),      # w_qkv (resident)
                pl.BlockSpec((1, 3 * HD),   lambda b: (0, 0)),      # b_qkv
                pl.BlockSpec((HD, D),       lambda b: (0, 0)),      # wo_t
                pl.BlockSpec((1, D),        lambda b: (0, 0)),      # bo
            ],
            out_specs=pl.BlockSpec((1, S, D), lambda b: (b, 0, 0)),
        ),
        compiler_params=pltpu.CompilerParams(
            dimension_semantics=("parallel",)),
    )(x, w_qkv, b_qkv, wo_t, bo2)


def reference(x, wq, bq, wk, bk, wv, bv, wo, bo, hidden_dim):
    """Pure-JAX mirror of the PyTorch forward (weight layout [out, in])."""
    B = x.shape[0]
    H = wq.shape[0]
    outs = []
    for b in range(B):
        heads = []
        for h in range(H):
            q = x[b] @ wq[h].T + bq[h]
            k = x[b] @ wk[h].T + bk[h]
            v = x[b] @ wv[h].T + bv[h]
            p = jax.nn.softmax((q @ k.T) / float(hidden_dim ** 2), axis=-1)
            heads.append(p @ v)
        outs.append(jnp.concatenate(heads, axis=-1))
    Hcat = jnp.stack(outs)                   # [B, S, H*D]
    return Hcat @ wo.T + bo


if __name__ == "__main__":
    B, S, D, H = 2, 8, 32, 4

    key = jax.random.PRNGKey(0)
    ks = jax.random.split(key, 9)
    lim = 1.0 / (D ** 0.5)
    lim_o = 1.0 / ((H * D) ** 0.5)

    x = jax.random.normal(ks[0], (B, S, D), dtype=jnp.float32)

    # PyTorch nn.Linear layout: weight [out, in], bias [out].
    wq = jax.random.uniform(ks[1], (H, D, D), jnp.float32, -lim, lim)
    bq = jax.random.uniform(ks[2], (H, D),    jnp.float32, -lim, lim)
    wk = jax.random.uniform(ks[3], (H, D, D), jnp.float32, -lim, lim)
    bk = jax.random.uniform(ks[4], (H, D),    jnp.float32, -lim, lim)
    wv = jax.random.uniform(ks[5], (H, D, D), jnp.float32, -lim, lim)
    bv = jax.random.uniform(ks[6], (H, D),    jnp.float32, -lim, lim)
    wo = jax.random.uniform(ks[7], (D, H * D), jnp.float32, -lim_o, lim_o)
    bo = jax.random.uniform(ks[8], (D,),       jnp.float32, -lim_o, lim_o)

    out = quant_mhsa(x, wq, bq, wk, bk, wv, bv, wo, bo)
    out = jax.block_until_ready(out)

    ref = reference(x, wq, bq, wk, bk, wv, bv, wo, bo, D)
    assert out.shape == (B, S, D)
    # Slightly loosened vs exact-f32 because the softmax denominator uses the
    # EUP approximate reciprocal (pl.reciprocal(..., approx=True)).
    assert jnp.allclose(out, ref, atol=1e-3, rtol=1e-3), "mismatch vs reference"

    print("KERNEL_OK")
</pallas_src>

<mosaic_0001>
module attributes {stable_mosaic.version = 11 : i64} {
  func.func @mhsa_kernel(%arg0: i32, %arg1: memref<1x8x32xf32, #tpu.memory_space<vmem>>, %arg2: memref<32x384xf32, #tpu.memory_space<vmem>>, %arg3: memref<1x384xf32, #tpu.memory_space<vmem>>, %arg4: memref<128x32xf32, #tpu.memory_space<vmem>>, %arg5: memref<1x32xf32, #tpu.memory_space<vmem>>, %arg6: memref<1x8x32xf32, #tpu.memory_space<vmem>>) attributes {dimension_semantics = [#tpu.dimension_semantics<parallel>], iteration_bounds = array<i64: 2>, scalar_prefetch = 0 : i64, scratch_operands = 0 : i64, tpu.core_type = #tpu.core_type<tc>, window_params = [{transform_indices = @transform_0, window_bounds = array<i64: 1, 8, 32>}, {pipeline_mode = #tpu.pipeline_mode<synchronous>, transform_indices = @transform_1, window_bounds = array<i64: 32, 384>}, {pipeline_mode = #tpu.pipeline_mode<synchronous>, transform_indices = @transform_2, window_bounds = array<i64: 1, 384>}, {pipeline_mode = #tpu.pipeline_mode<synchronous>, transform_indices = @transform_3, window_bounds = array<i64: 128, 32>}, {pipeline_mode = #tpu.pipeline_mode<synchronous>, transform_indices = @transform_4, window_bounds = array<i64: 1, 32>}, {transform_indices = @transform_5, window_bounds = array<i64: 1, 8, 32>}]} {
    %c0 = arith.constant 0 : index
    %c0_0 = arith.constant 0 : index
    %c0_1 = arith.constant 0 : index
    %0 = vector.load %arg1[%c0, %c0_0, %c0_1] : memref<1x8x32xf32, #tpu.memory_space<vmem>>, vector<1x8x32xf32>
    %1 = vector.shape_cast %0 : vector<1x8x32xf32> to vector<8x32xf32>
    %c0_2 = arith.constant 0 : index
    %c0_3 = arith.constant 0 : index
    %2 = vector.load %arg2[%c0_2, %c0_3] : memref<32x384xf32, #tpu.memory_space<vmem>>, vector<32x384xf32>
    %cst = arith.constant dense<0.000000e+00> : vector<8x384xf32>
    %3 = tpu.matmul %1, %2, %cst {dimension_numbers = #tpu.dot_dimension_numbers<[1], [0], [0], [1], [0, 0, 1, 1], [], []>} : vector<8x32xf32>, vector<32x384xf32>, vector<8x384xf32> -> vector<8x384xf32>
    %c0_4 = arith.constant 0 : index
    %c0_5 = arith.constant 0 : index
    %4 = vector.load %arg3[%c0_4, %c0_5] : memref<1x384xf32, #tpu.memory_space<vmem>>, vector<1x384xf32>
    %5 = vector.broadcast %4 : vector<1x384xf32> to vector<8x384xf32>
    %6 = arith.addf %3, %5 : vector<8x384xf32>
    %7 = vector.extract_strided_slice %6 {offsets = [0, 0], sizes = [8, 32], strides = [1, 1]} : vector<8x384xf32> to vector<8x32xf32>
    %8 = vector.extract_strided_slice %6 {offsets = [0, 128], sizes = [8, 32], strides = [1, 1]} : vector<8x384xf32> to vector<8x32xf32>
    %9 = vector.extract_strided_slice %6 {offsets = [0, 256], sizes = [8, 32], strides = [1, 1]} : vector<8x384xf32> to vector<8x32xf32>
    %10 = tpu.transpose %8, [1, 0] : vector<8x32xf32> -> vector<32x8xf32>
    %cst_6 = arith.constant dense<0.000000e+00> : vector<8x8xf32>
    %11 = tpu.matmul %7, %10, %cst_6 {dimension_numbers = #tpu.dot_dimension_numbers<[1], [0], [0], [1], [0, 0, 1, 1], [], []>} : vector<8x32xf32>, vector<32x8xf32>, vector<8x8xf32> -> vector<8x8xf32>
    %cst_7 = arith.constant dense<0xFF800000> : vector<8xf32>
    %12 = vector.multi_reduction <maximumf>, %11, %cst_7 [1] : vector<8x8xf32> to vector<8xf32>
    %13 = vector.shape_cast %12 : vector<8xf32> to vector<8x1xf32>
    %14 = vector.broadcast %13 : vector<8x1xf32> to vector<8x8xf32>
    %15 = arith.subf %11, %14 : vector<8x8xf32>
    %16 = math.exp %15 : vector<8x8xf32>
    %cst_8 = arith.constant dense<0.000000e+00> : vector<8xf32>
    %17 = vector.multi_reduction <add>, %16, %cst_8 [1] : vector<8x8xf32> to vector<8xf32>
    %18 = vector.shape_cast %17 : vector<8xf32> to vector<8x1xf32>
    %19 = tpu.reciprocal %18 {approx = true} : vector<8x1xf32> -> vector<8x1xf32>
    %20 = vector.broadcast %19 : vector<8x1xf32> to vector<8x8xf32>
    %21 = arith.mulf %16, %20 : vector<8x8xf32>
    %cst_9 = arith.constant dense<0.000000e+00> : vector<8x32xf32>
    %22 = tpu.matmul %21, %9, %cst_9 {dimension_numbers = #tpu.dot_dimension_numbers<[1], [0], [0], [1], [0, 0, 1, 1], [], []>} : vector<8x8xf32>, vector<8x32xf32>, vector<8x32xf32> -> vector<8x32xf32>
    %23 = vector.extract_strided_slice %6 {offsets = [0, 32], sizes = [8, 32], strides = [1, 1]} : vector<8x384xf32> to vector<8x32xf32>
    %24 = vector.extract_strided_slice %6 {offsets = [0, 160], sizes = [8, 32], strides = [1, 1]} : vector<8x384xf32> to vector<8x32xf32>
    %25 = vector.extract_strided_slice %6 {offsets = [0, 288], sizes = [8, 32], strides = [1, 1]} : vector<8x384xf32> to vector<8x32xf32>
    %26 = tpu.transpose %24, [1, 0] : vector<8x32xf32> -> vector<32x8xf32>
    %cst_10 = arith.constant dense<0.000000e+00> : vector<8x8xf32>
    %27 = tpu.matmul %23, %26, %cst_10 {dimension_numbers = #tpu.dot_dimension_numbers<[1], [0], [0], [1], [0, 0, 1, 1], [], []>} : vector<8x32xf32>, vector<32x8xf32>, vector<8x8xf32> -> vector<8x8xf32>
    %cst_11 = arith.constant dense<0xFF800000> : vector<8xf32>
    %28 = vector.multi_reduction <maximumf>, %27, %cst_11 [1] : vector<8x8xf32> to vector<8xf32>
    %29 = vector.shape_cast %28 : vector<8xf32> to vector<8x1xf32>
    %30 = vector.broadcast %29 : vector<8x1xf32> to vector<8x8xf32>
    %31 = arith.subf %27, %30 : vector<8x8xf32>
    %32 = math.exp %31 : vector<8x8xf32>
    %cst_12 = arith.constant dense<0.000000e+00> : vector<8xf32>
    %33 = vector.multi_reduction <add>, %32, %cst_12 [1] : vector<8x8xf32> to vector<8xf32>
    %34 = vector.shape_cast %33 : vector<8xf32> to vector<8x1xf32>
    %35 = tpu.reciprocal %34 {approx = true} : vector<8x1xf32> -> vector<8x1xf32>
    %36 = vector.broadcast %35 : vector<8x1xf32> to vector<8x8xf32>
    %37 = arith.mulf %32, %36 : vector<8x8xf32>
    %cst_13 = arith.constant dense<0.000000e+00> : vector<8x32xf32>
    %38 = tpu.matmul %37, %25, %cst_13 {dimension_numbers = #tpu.dot_dimension_numbers<[1], [0], [0], [1], [0, 0, 1, 1], [], []>} : vector<8x8xf32>, vector<8x32xf32>, vector<8x32xf32> -> vector<8x32xf32>
    %39 = vector.extract_strided_slice %6 {offsets = [0, 64], sizes = [8, 32], strides = [1, 1]} : vector<8x384xf32> to vector<8x32xf32>
    %40 = vector.extract_strided_slice %6 {offsets = [0, 192], sizes = [8, 32], strides = [1, 1]} : vector<8x384xf32> to vector<8x32xf32>
    %41 = vector.extract_strided_slice %6 {offsets = [0, 320], sizes = [8, 32], strides = [1, 1]} : vector<8x384xf32> to vector<8x32xf32>
    %42 = tpu.transpose %40, [1, 0] : vector<8x32xf32> -> vector<32x8xf32>
    %cst_14 = arith.constant dense<0.000000e+00> : vector<8x8xf32>
    %43 = tpu.matmul %39, %42, %cst_14 {dimension_numbers = #tpu.dot_dimension_numbers<[1], [0], [0], [1], [0, 0, 1, 1], [], []>} : vector<8x32xf32>, vector<32x8xf32>, vector<8x8xf32> -> vector<8x8xf32>
    %cst_15 = arith.constant dense<0xFF800000> : vector<8xf32>
    %44 = vector.multi_reduction <maximumf>, %43, %cst_15 [1] : vector<8x8xf32> to vector<8xf32>
    %45 = vector.shape_cast %44 : vector<8xf32> to vector<8x1xf32>
    %46 = vector.broadcast %45 : vector<8x1xf32> to vector<8x8xf32>
    %47 = arith.subf %43, %46 : vector<8x8xf32>
    %48 = math.exp %47 : vector<8x8xf32>
    %cst_16 = arith.constant dense<0.000000e+00> : vector<8xf32>
    %49 = vector.multi_reduction <add>, %48, %cst_16 [1] : vector<8x8xf32> to vector<8xf32>
    %50 = vector.shape_cast %49 : vector<8xf32> to vector<8x1xf32>
    %51 = tpu.reciprocal %50 {approx = true} : vector<8x1xf32> -> vector<8x1xf32>
    %52 = vector.broadcast %51 : vector<8x1xf32> to vector<8x8xf32>
    %53 = arith.mulf %48, %52 : vector<8x8xf32>
    %cst_17 = arith.constant dense<0.000000e+00> : vector<8x32xf32>
    %54 = tpu.matmul %53, %41, %cst_17 {dimension_numbers = #tpu.dot_dimension_numbers<[1], [0], [0], [1], [0, 0, 1, 1], [], []>} : vector<8x8xf32>, vector<8x32xf32>, vector<8x32xf32> -> vector<8x32xf32>
    %55 = vector.extract_strided_slice %6 {offsets = [0, 96], sizes = [8, 32], strides = [1, 1]} : vector<8x384xf32> to vector<8x32xf32>
    %56 = vector.extract_strided_slice %6 {offsets = [0, 224], sizes = [8, 32], strides = [1, 1]} : vector<8x384xf32> to vector<8x32xf32>
    %57 = vector.extract_strided_slice %6 {offsets = [0, 352], sizes = [8, 32], strides = [1, 1]} : vector<8x384xf32> to vector<8x32xf32>
    %58 = tpu.transpose %56, [1, 0] : vector<8x32xf32> -> vector<32x8xf32>
    %cst_18 = arith.constant dense<0.000000e+00> : vector<8x8xf32>
    %59 = tpu.matmul %55, %58, %cst_18 {dimension_numbers = #tpu.dot_dimension_numbers<[1], [0], [0], [1], [0, 0, 1, 1], [], []>} : vector<8x32xf32>, vector<32x8xf32>, vector<8x8xf32> -> vector<8x8xf32>
    %cst_19 = arith.constant dense<0xFF800000> : vector<8xf32>
    %60 = vector.multi_reduction <maximumf>, %59, %cst_19 [1] : vector<8x8xf32> to vector<8xf32>
    %61 = vector.shape_cast %60 : vector<8xf32> to vector<8x1xf32>
    %62 = vector.broadcast %61 : vector<8x1xf32> to vector<8x8xf32>
    %63 = arith.subf %59, %62 : vector<8x8xf32>
    %64 = math.exp %63 : vector<8x8xf32>
    %cst_20 = arith.constant dense<0.000000e+00> : vector<8xf32>
    %65 = vector.multi_reduction <add>, %64, %cst_20 [1] : vector<8x8xf32> to vector<8xf32>
    %66 = vector.shape_cast %65 : vector<8xf32> to vector<8x1xf32>
    %67 = tpu.reciprocal %66 {approx = true} : vector<8x1xf32> -> vector<8x1xf32>
    %68 = vector.broadcast %67 : vector<8x1xf32> to vector<8x8xf32>
    %69 = arith.mulf %64, %68 : vector<8x8xf32>
    %cst_21 = arith.constant dense<0.000000e+00> : vector<8x32xf32>
    %70 = tpu.matmul %69, %57, %cst_21 {dimension_numbers = #tpu.dot_dimension_numbers<[1], [0], [0], [1], [0, 0, 1, 1], [], []>} : vector<8x8xf32>, vector<8x32xf32>, vector<8x32xf32> -> vector<8x32xf32>
    %71 = tpu.concatenate %22, %38, %54, %70 in 1 : vector<8x32xf32>, vector<8x32xf32>, vector<8x32xf32>, vector<8x32xf32> -> vector<8x128xf32>
    %c0_22 = arith.constant 0 : index
    %c0_23 = arith.constant 0 : index
    %72 = vector.load %arg4[%c0_22, %c0_23] : memref<128x32xf32, #tpu.memory_space<vmem>>, vector<128x32xf32>
    %cst_24 = arith.constant dense<0.000000e+00> : vector<8x32xf32>
    %73 = tpu.matmul %71, %72, %cst_24 {dimension_numbers = #tpu.dot_dimension_numbers<[1], [0], [0], [1], [0, 0, 1, 1], [], []>} : vector<8x128xf32>, vector<128x32xf32>, vector<8x32xf32> -> vector<8x32xf32>
    %c0_25 = arith.constant 0 : index
    %c0_26 = arith.constant 0 : index
    %74 = vector.load %arg5[%c0_25, %c0_26] : memref<1x32xf32, #tpu.memory_space<vmem>>, vector<1x32xf32>
    %75 = vector.broadcast %74 : vector<1x32xf32> to vector<8x32xf32>
    %76 = arith.addf %73, %75 : vector<8x32xf32>
    %c0_27 = arith.constant 0 : index
    %c0_28 = arith.constant 0 : index
    %c0_29 = arith.constant 0 : index
    %77 = vector.load %arg6[%c0_27, %c0_28, %c0_29] : memref<1x8x32xf32, #tpu.memory_space<vmem>>, vector<1x8x32xf32>
    %78 = vector.shape_cast %77 : vector<1x8x32xf32> to vector<8x32xf32>
    %79 = vector.shape_cast %76 : vector<8x32xf32> to vector<1x8x32xf32>
    tpu.vector_store %arg6[%c0_27, %c0_28, %c0_29], %79 {strides = array<i32>} : memref<1x8x32xf32, #tpu.memory_space<vmem>>, vector<1x8x32xf32>,
    return
  }
  func.func @transform_0(%arg0: i32) -> (i32, i32, i32) {
    %c0_i32 = arith.constant 0 : i32
    %c0_i32_0 = arith.constant 0 : i32
    %c0_i32_1 = arith.constant 0 : i32
    return %arg0, %c0_i32, %c0_i32_0 : i32, i32, i32
  }
  func.func @transform_1(%arg0: i32) -> (i32, i32) {
    %c0_i32 = arith.constant 0 : i32
    %c0_i32_0 = arith.constant 0 : i32
    %c0_i32_1 = arith.constant 0 : i32
    return %c0_i32, %c0_i32_0 : i32, i32
  }
  func.func @transform_2(%arg0: i32) -> (i32, i32) {
    %c0_i32 = arith.constant 0 : i32
    %c0_i32_0 = arith.constant 0 : i32
    %c0_i32_1 = arith.constant 0 : i32
    return %c0_i32, %c0_i32_0 : i32, i32
  }
  func.func @transform_3(%arg0: i32) -> (i32, i32) {
    %c0_i32 = arith.constant 0 : i32
    %c0_i32_0 = arith.constant 0 : i32
    %c0_i32_1 = arith.constant 0 : i32
    return %c0_i32, %c0_i32_0 : i32, i32
  }
  func.func @transform_4(%arg0: i32) -> (i32, i32) {
    %c0_i32 = arith.constant 0 : i32
    %c0_i32_0 = arith.constant 0 : i32
    %c0_i32_1 = arith.constant 0 : i32
    return %c0_i32, %c0_i32_0 : i32, i32
  }
  func.func @transform_5(%arg0: i32) -> (i32, i32, i32) {
    %c0_i32 = arith.constant 0 : i32
    %c0_i32_0 = arith.constant 0 : i32
    %c0_i32_1 = arith.constant 0 : i32
    return %arg0, %c0_i32, %c0_i32_0 : i32, i32, i32
  }
}

</mosaic_0001>

<llo_original>
// kernel: tpu_custom_call.1
$region0: #{tpu_custom_call.1}
  #allocation0 [shape = 'u32[]', space=smem, size = 0x4, offset = 0x4, fixed_abs, tag = 'smem constant byte address 0x4 - core index']
  #allocation1 [shape = 'u32[144,128]{1,0:T(1,128)}', space=vmem, size = 0x12000, scoped, tag = 'internal scratch']
  %s0 = inlined_call_operand.vmem [shape: f32[2,8,32], index: 0, kind: input, shape index: {}]
  %s1 = inlined_call_operand.vmem [shape: f32[32,384], index: 1, kind: input, shape index: {}]
  %s2 = inlined_call_operand.vmem [shape: f32[1,384], index: 2, kind: input, shape index: {}]
  %s3 = inlined_call_operand.vmem [shape: f32[128,32], index: 3, kind: input, shape index: {}]
  %s4 = inlined_call_operand.vmem [shape: f32[1,32], index: 4, kind: input, shape index: {}]
  %s5 = inlined_call_operand.hbm [shape: f32[2,8,32], index: 5, kind: output, shape index: {}]
  %s6 = sld [smem:[#allocation0]]
  $region53: #{tpu_custom_call.1} parent=0
    _
  %s8 = ssub.s32 1, %s6
  %s9 = scalar_select 0, %s8, %s6
  $region1: #{tpu_custom_call.1} parent=0
    #allocation2 [shape = 'u8[8192]{0}', space=vmem, size = 0x2000, scoped, tag = 'output window, operand 0']
    #allocation3 [shape = 's32[2]{0}', space=sflag, size = 0x8, scoped, tag = 'scoped memory for tpu_custom_call.1']
    %10 = vsyncpa [#allocation3], 0
    %s11 = scalar_lea.sflag [#allocation3], 1
    %12 = vsyncpa %s11, 0
    loop: start=0, step=1, limit=4
    $region2: #{tpu_custom_call.1} parent=1 // loop_pre_header
      _
    $region3: #{tpu_custom_call.1} parent=1 // loop_header
      %s14 = sphi 0, %s18
      %p15 = scmp.ge.s32.totalorder %s14, 4
      %s24 = sphi 0, %s26
      %s27 = sphi 0, %s24
      %s28 = sphi 0, %s27
      %s44 = sphi 0, %s28
      %s48 = sphi 0, %s48
      %s50 = sphi 0, %s48
      %s51 = sphi 0, %s50
      %s65 = sphi 0, %s51
      %s69 = sphi 0, %s69
      %s71 = sphi 0, %s69
      %s72 = sphi 0, %s71
      %s86 = sphi 0, %s72
      %s90 = sphi 0, %s90
      %s92 = sphi 0, %s90
      %s93 = sphi 0, %s92
      %s107 = sphi 0, %s93
      %s111 = sphi 0, %s111
      %s113 = sphi 0, %s111
      %s114 = sphi 0, %s113
      %s128 = sphi 0, %s114
      %s134 = sphi 0, %s136
      %s137 = sphi 0, %s134
      %s138 = sphi 0, %s137
      %s154 = sphi 0, %s138
    $region4: #{tpu_custom_call.1} parent=1 // loop_header_branch
      %17 = sbr.rel (%p15) target = $region8
    $region5: #{tpu_custom_call.1} parent=1 // loop_body
      %s19 = ssub.s32 %s14, 1
      %s20 = ssub.s32 %s14, 2
      %s21 = sadd.s32 %s14, 1
      %s22 = ssub.s32 %s14, %s21
      %p23 = scmp.eq.s32.totalorder %s22, 0
      %s25 = sadd.s32 %s24, 1
      %s26 = scalar_select %p23, %s24, %s25
      %p29 = pneg %p23
      %p30 = scmp.eq.s32.totalorder %s14, 1
      %p31 = por %p29, %p30
      %p32 = scmp.ne.s32.totalorder %s24, %s27
      %p33 = scmp.eq.s32.totalorder %s14, 0
      %p34 = por %p32, %p33
      %p35 = scmp.ne.s32.totalorder %s24, %s27
      %p36 = scmp.eq.s32.totalorder %s19, 1
      %p37 = por %p35, %p36
      %p38 = scmp.ne.s32.totalorder %s27, %s28
      %p39 = scmp.eq.s32.totalorder %s19, 0
      %p40 = por %p38, %p39
      %p41 = scmp.ne.s32.totalorder %s27, %s28
      %p42 = scmp.eq.s32.totalorder %s20, 1
      %p43 = por %p41, %p42
      %p45 = scmp.ne.s32.totalorder %s28, %s44
      %p46 = scmp.eq.s32.totalorder %s20, 0
      %p47 = por %p45, %p46
      %s49 = sadd.s32 %s48, 1
      %p52 = scmp.eq.s32.totalorder %s14, 1
      %p53 = scmp.ne.s32.totalorder %s48, %s50
      %p54 = scmp.eq.s32.totalorder %s14, 0
      %p55 = por %p53, %p54
      %p56 = scmp.ne.s32.totalorder %s48, %s50
      %p57 = scmp.eq.s32.totalorder %s19, 1
      %p58 = por %p56, %p57
      %p59 = scmp.ne.s32.totalorder %s50, %s51
      %p60 = scmp.eq.s32.totalorder %s19, 0
      %p61 = por %p59, %p60
      %p62 = scmp.ne.s32.totalorder %s50, %s51
      %p63 = scmp.eq.s32.totalorder %s20, 1
      %p64 = por %p62, %p63
      %p66 = scmp.ne.s32.totalorder %s51, %s65
      %p67 = scmp.eq.s32.totalorder %s20, 0
      %p68 = por %p66, %p67
      %s70 = sadd.s32 %s69, 1
      %p73 = scmp.eq.s32.totalorder %s14, 1
      %p74 = scmp.ne.s32.totalorder %s69, %s71
      %p75 = scmp.eq.s32.totalorder %s14, 0
      %p76 = por %p74, %p75
      %p77 = scmp.ne.s32.totalorder %s69, %s71
      %p78 = scmp.eq.s32.totalorder %s19, 1
      %p79 = por %p77, %p78
      %p80 = scmp.ne.s32.totalorder %s71, %s72
      %p81 = scmp.eq.s32.totalorder %s19, 0
      %p82 = por %p80, %p81
      %p83 = scmp.ne.s32.totalorder %s71, %s72
      %p84 = scmp.eq.s32.totalorder %s20, 1
      %p85 = por %p83, %p84
      %p87 = scmp.ne.s32.totalorder %s72, %s86
      %p88 = scmp.eq.s32.totalorder %s20, 0
      %p89 = por %p87, %p88
      %s91 = sadd.s32 %s90, 1
      %p94 = scmp.eq.s32.totalorder %s14, 1
      %p95 = scmp.ne.s32.totalorder %s90, %s92
      %p96 = scmp.eq.s32.totalorder %s14, 0
      %p97 = por %p95, %p96
      %p98 = scmp.ne.s32.totalorder %s90, %s92
      %p99 = scmp.eq.s32.totalorder %s19, 1
      %p100 = por %p98, %p99
      %p101 = scmp.ne.s32.totalorder %s92, %s93
      %p102 = scmp.eq.s32.totalorder %s19, 0
      %p103 = por %p101, %p102
      %p104 = scmp.ne.s32.totalorder %s92, %s93
      %p105 = scmp.eq.s32.totalorder %s20, 1
      %p106 = por %p104, %p105
      %p108 = scmp.ne.s32.totalorder %s93, %s107
      %p109 = scmp.eq.s32.totalorder %s20, 0
      %p110 = por %p108, %p109
      %s112 = sadd.s32 %s111, 1
      %p115 = scmp.eq.s32.totalorder %s14, 1
      %p116 = scmp.ne.s32.totalorder %s111, %s113
      %p117 = scmp.eq.s32.totalorder %s14, 0
      %p118 = por %p116, %p117
      %p119 = scmp.ne.s32.totalorder %s111, %s113
      %p120 = scmp.eq.s32.totalorder %s19, 1
      %p121 = por %p119, %p120
      %p122 = scmp.ne.s32.totalorder %s113, %s114
      %p123 = scmp.eq.s32.totalorder %s19, 0
      %p124 = por %p122, %p123
      %p125 = scmp.ne.s32.totalorder %s113, %s114
      %p126 = scmp.eq.s32.totalorder %s20, 1
      %p127 = por %p125, %p126
      %p129 = scmp.ne.s32.totalorder %s114, %s128
      %p130 = scmp.eq.s32.totalorder %s20, 0
      %p131 = por %p129, %p130
      %s132 = ssub.s32 %s14, %s21
      %p133 = scmp.eq.s32.totalorder %s132, 0
      %s135 = sadd.s32 %s134, 1
      %s136 = scalar_select %p133, %s134, %s135
      %p139 = pneg %p133
      %p140 = scmp.eq.s32.totalorder %s14, 1
      %p141 = por %p139, %p140
      %p142 = scmp.ne.s32.totalorder %s134, %s137
      %p143 = scmp.eq.s32.totalorder %s14, 0
      %p144 = por %p142, %p143
      %p145 = scmp.ne.s32.totalorder %s134, %s137
      %p146 = scmp.eq.s32.totalorder %s19, 1
      %p147 = por %p145, %p146
      %p148 = scmp.ne.s32.totalorder %s137, %s138
      %p149 = scmp.eq.s32.totalorder %s19, 0
      %p150 = por %p148, %p149
      %p151 = scmp.ne.s32.totalorder %s137, %s138
      %p152 = scmp.eq.s32.totalorder %s20, 1
      %p153 = por %p151, %p152
      %p155 = scmp.ne.s32.totalorder %s138, %s154
      %p156 = scmp.eq.s32.totalorder %s20, 0
      %p157 = por %p155, %p156
      %p158 = scmp.le.s32.totalorder 1, %s14
      %p159 = scmp.lt.s32.totalorder %s14, 3
      %p160 = pnand %p158, %p159
      %p161 = pneg %p160
      // Predicated region
      $region9: #{tpu_custom_call.1} parent=5 // pred_check
        _
      $region10: #{tpu_custom_call.1} parent=5 // pred_check_branch
        %163 = sbr.rel (%p160) target = $region12
      $region11: #{tpu_custom_call.1} parent=5 // pred_region
        %s164 = ssub.s32 %s14, 1
        // Predicated region
        $region13: #{tpu_custom_call.1} parent=11 // pred_check
          %p165 = pneg %p61
        $region14: #{tpu_custom_call.1} parent=11 // pred_check_branch
          %167 = sbr.rel (%p165) target = $region16
        $region15: #{tpu_custom_call.1} parent=11 // pred_region
          _
        $region16: #{tpu_custom_call.1} parent=11 // pred_fallthru
          _
        // Predicated region
        $region17: #{tpu_custom_call.1} parent=11 // pred_check
          %p168 = pneg %p82
        $region18: #{tpu_custom_call.1} parent=11 // pred_check_branch
          %170 = sbr.rel (%p168) target = $region20
        $region19: #{tpu_custom_call.1} parent=11 // pred_region
          _
        $region20: #{tpu_custom_call.1} parent=11 // pred_fallthru
          _
        // Predicated region
        $region21: #{tpu_custom_call.1} parent=11 // pred_check
          %p171 = pneg %p103
        $region22: #{tpu_custom_call.1} parent=11 // pred_check_branch
          %173 = sbr.rel (%p171) target = $region24
        $region23: #{tpu_custom_call.1} parent=11 // pred_region
          _
        $region24: #{tpu_custom_call.1} parent=11 // pred_fallthru
          _
        // Predicated region
        $region25: #{tpu_custom_call.1} parent=11 // pred_check
          %p174 = pneg %p124
        $region26: #{tpu_custom_call.1} parent=11 // pred_check_branch
          %176 = sbr.rel (%p174) target = $region28
        $region27: #{tpu_custom_call.1} parent=11 // pred_region
          _
        $region28: #{tpu_custom_call.1} parent=11 // pred_fallthru
          _
      $region12: #{tpu_custom_call.1} parent=5 // pred_fallthru
        _
      %p177 = scmp.lt.s32.totalorder %s14, 2
      // Predicated region
      $region29: #{tpu_custom_call.1} parent=5 // pred_check
        %p178 = pneg %p177
      $region30: #{tpu_custom_call.1} parent=5 // pred_check_branch
        %180 = sbr.rel (%p178) target = $region32
      $region31: #{tpu_custom_call.1} parent=5 // pred_region
        // Predicated region
        $region33: #{tpu_custom_call.1} parent=31 // pred_check
          %p181 = pneg %p34
        $region34: #{tpu_custom_call.1} parent=31 // pred_check_branch
          %183 = sbr.rel (%p181) target = $region36
        $region35: #{tpu_custom_call.1} parent=31 // pred_region
          %p184 = scmp.lt.s32.totalorder %s14, 1
          %s185 = scalar_select %p184, %s14, 1
          %s186 = smul.addr %s185, 8
          %s187 = scalar_lea.vmem %s0, %s186
        $region36: #{tpu_custom_call.1} parent=31 // pred_fallthru
          _
      $region32: #{tpu_custom_call.1} parent=5 // pred_fallthru
        _
      %p188 = scmp.le.s32.totalorder 1, %s14
      %p189 = scmp.lt.s32.totalorder %s14, 3
      %p190 = pnand %p188, %p189
      %p191 = pneg %p190
      // Predicated region
      $region37: #{tpu_custom_call.1} parent=5 // pred_check
        _
      $region38: #{tpu_custom_call.1} parent=5 // pred_check_branch
        %193 = sbr.rel (%p190) target = $region40
      $region39: #{tpu_custom_call.1} parent=5 // pred_region
        %s194 = ssub.s32 %s14, 1
        %p195 = scmp.lt.s32.totalorder %s19, 1
        %s196 = scalar_select %p195, %s19, 1
        %s197 = smul.addr %s196, 8
        %s198 = scalar_lea.vmem %s0, %s197
        %p199 = pneg %p40
        %p200 = pneg %p37
        %p201 = pneg %p61
        %p202 = pneg %p58
        %p203 = pneg %p82
        %p204 = pneg %p79
        %p205 = pneg %p103
        %p206 = pneg %p100
        %p207 = pneg %p124
        %p208 = pneg %p121
        %p209 = pneg %p150
        %p210 = pneg %p147
        %s211 = sand.u32 %s137, 1
        %s212 = scalar_lea.sflag [#allocation3], %s211
        %s213 = sand.u32 %s137, 1
        %s214 = smul.addr %s213, 8
        %s215 = scalar_lea.vmem [#allocation2], %s214
        %p216 = scmp.lt.s32.totalorder %s19, 1
        %s217 = scalar_select %p216, %s19, 1
        %s218 = smul.addr %s217, 8
        %s219 = scalar_lea.vmem %s0, %s218
        %v220 = vld [vmem:[%s219] sm:$0xff]
        %v221 = vld [vmem:[%s1] sm:$0xff]
        %v222 = vld [vmem:[%s1 + $0x8] sm:$0xff]
        %v223 = vld [vmem:[%s1 + $0x10] sm:$0xff]
        %v224 = vld [vmem:[%s1 + $0x18] sm:$0xff]
        %v225 = vld [vmem:[%s1 + $0x20] sm:$0xff]
        %v226 = vld [vmem:[%s1 + $0x28] sm:$0xff]
        %v227 = vld [vmem:[%s1 + $0x30] sm:$0xff]
        %v228 = vld [vmem:[%s1 + $0x38] sm:$0xff]
        %v229 = vld [vmem:[%s1 + $0x40] sm:$0xff]
        %v230 = vld [vmem:[%s1 + $0x48] sm:$0xff]
        %v231 = vld [vmem:[%s1 + $0x50] sm:$0xff]
        %v232 = vld [vmem:[%s1 + $0x58] sm:$0xff]
        %v233 = vld [vmem:[%s2] sm:$0x7]
        %v235 = vlaneseq
        %v236 = vshrl.u32 %v235, 7
        %v237 = vsub.s32 0, %v236
        %v238 = vrot.slane %v233, %v237
        %v239 = vlaneseq
        %v240 = vshrl.u32 %v239, 7
        %v241 = vsub.s32 1, %v240
        %v242 = vrot.slane %v233, %v241
        %v243 = vlaneseq
        %v244 = vshrl.u32 %v243, 7
        %v245 = vsub.s32 2, %v244
        %v246 = vrot.slane %v233, %v245
        %vm250 = vcmask 261120
        %v252 = vsel %vm250, %v220, 0
        %254 = vmatprep.subr.mxu0 %v222
        %255 = vmatpush1.msra.mxu0 %v221
        %256 = vmatprep.subr.mxu0 %v225
        %257 = vmatpush1.msra.mxu0 %v224
        %258 = vmatprep.subr.mxu0 %v228
        %259 = vmatpush1.msra.mxu0 %v227
        %260 = vmatprep.subr.mxu0 %v231
        %261 = vmatpush1.msra.mxu0 %v230
        %262 = vmatprep.subr.mxu0 0.0
        %263 = vmatpush1.msra.mxu0 0.0
        %264 = vmatprep.subr.mxu0 0.0
        %265 = vmatpush1.msra.mxu0 0.0
        %266 = vmatprep.subr.mxu0 0.0
        %267 = vmatpush1.msra.mxu0 0.0
        %268 = vmatprep.subr.mxu0 0.0
        %269 = vmatpush1.msra.mxu0 0.0
        %270 = vmatprep.subr.mxu0 0.0
        %271 = vmatpush1.msra.mxu0 0.0
        %272 = vmatprep.subr.mxu0 0.0
        %273 = vmatpush1.msra.mxu0 0.0
        %274 = vmatprep.subr.mxu0 0.0
        %275 = vmatpush1.msra.mxu0 0.0
        %276 = vmatprep.subr.mxu0 0.0
        %277 = vmatpush1.msra.mxu0 0.0
        %278 = vmatprep.subr.mxu0 0.0
        %279 = vmatpush1.msra.mxu0 0.0
        %280 = vmatprep.subr.mxu0 0.0
        %281 = vmatpush1.msra.mxu0 0.0
        %282 = vmatprep.subr.mxu0 0.0
        %283 = vmatpush1.msra.mxu0 0.0
        %284 = vmatprep.subr.mxu0 0.0
        %285 = vmatpush1.msra.mxu0 0.0
        %286 = vmatprep.subr.mxu0 0.0
        %287 = vmatpush1.msra.mxu0 0.0
        %288 = vmatprep.subr.mxu0 0.0
        %289 = vmatpush1.msra.mxu0 0.0
        %290 = vmatprep.subr.mxu0 0.0
        %291 = vmatpush1.msra.mxu0 0.0
        %292 = vmatprep.subr.mxu0 0.0
        %293 = vmatpush1.msra.mxu0 0.0
        %294 = vmatprep.subr.mxu0 0.0
        %295 = vmatpush1.msra.mxu0 0.0
        %296 = vmatprep.subr.mxu0 0.0
        %297 = vmatpush1.msra.mxu0 0.0
        %298 = vmatprep.subr.mxu0 0.0
        %299 = vmatpush1.msra.mxu0 0.0
        %300 = vmatprep.subr.mxu0 0.0
        %301 = vmatpush1.msra.mxu0 0.0
        %302 = vmatprep.subr.mxu0 0.0
        %303 = vmatpush1.msra.mxu0 0.0
        %304 = vmatprep.subr.mxu0 0.0
        %305 = vmatpush1.msra.mxu0 0.0
        %306 = vmatprep.subr.mxu0 0.0
        %307 = vmatpush1.msra.mxu0 0.0
        %308 = vmatprep.subr.mxu0 0.0
        %309 = vmatpush1.msra.mxu0 0.0
        %310 = vmatprep.subr.mxu0 0.0
        %311 = vmatpush1.msra.mxu0 0.0
        %312 = vmatprep.subr.mxu0 0.0
        %313 = vmatpush1.msra.mxu0 0.0
        %314 = vmatprep.subr.mxu0 0.0
        %315 = vmatpush1.msra.mxu0 0.0
        %316 = vmatprep.subr.mxu0 0.0
        %317 = vmatpush1.msra.mxu0 0.0
        %318 = vmatprep.mubr.f32.mxu0 0.0
        %319 = vmatmul.mubr.f32.gmra.mrb[0].mxu0 %v252
        %v320 = vpop.f32.mrb[0].mxu0
        %v321 = vadd.f32 %v238, %v320
        %v322 = vpop.f32.mrb[0].mxu0
        %v323 = vadd.f32 %v242, %v322
        %324 = vdwg.mxu0
        %325 = vmatprep.subr.mxu0 0.0
        %326 = vmatpush1.msra.mxu0 %v223
        %327 = vmatprep.subr.mxu0 0.0
        %328 = vmatpush1.msra.mxu0 %v226
        %329 = vmatprep.subr.mxu0 0.0
        %330 = vmatpush1.msra.mxu0 %v229
        %331 = vmatprep.subr.mxu0 0.0
        %332 = vmatpush1.msra.mxu0 %v232
        %333 = vmatprep.subr.mxu0 0.0
        %334 = vmatpush1.msra.mxu0 0.0
        %335 = vmatprep.subr.mxu0 0.0
        %336 = vmatpush1.msra.mxu0 0.0
        %337 = vmatprep.subr.mxu0 0.0
        %338 = vmatpush1.msra.mxu0 0.0
        %339 = vmatprep.subr.mxu0 0.0
        %340 = vmatpush1.msra.mxu0 0.0
        %341 = vmatprep.subr.mxu0 0.0
        %342 = vmatpush1.msra.mxu0 0.0
        %343 = vmatprep.subr.mxu0 0.0
        %344 = vmatpush1.msra.mxu0 0.0
        %345 = vmatprep.subr.mxu0 0.0
        %346 = vmatpush1.msra.mxu0 0.0
        %347 = vmatprep.subr.mxu0 0.0
        %348 = vmatpush1.msra.mxu0 0.0
        %349 = vmatprep.subr.mxu0 0.0
        %350 = vmatpush1.msra.mxu0 0.0
        %351 = vmatprep.subr.mxu0 0.0
        %352 = vmatpush1.msra.mxu0 0.0
        %353 = vmatprep.subr.mxu0 0.0
        %354 = vmatpush1.msra.mxu0 0.0
        %355 = vmatprep.subr.mxu0 0.0
        %356 = vmatpush1.msra.mxu0 0.0
        %357 = vmatprep.subr.mxu0 0.0
        %358 = vmatpush1.msra.mxu0 0.0
        %359 = vmatprep.subr.mxu0 0.0
        %360 = vmatpush1.msra.mxu0 0.0
        %361 = vmatprep.subr.mxu0 0.0
        %362 = vmatpush1.msra.mxu0 0.0
        %363 = vmatprep.subr.mxu0 0.0
        %364 = vmatpush1.msra.mxu0 0.0
        %365 = vmatprep.subr.mxu0 0.0
        %366 = vmatpush1.msra.mxu0 0.0
        %367 = vmatprep.subr.mxu0 0.0
        %368 = vmatpush1.msra.mxu0 0.0
        %369 = vmatprep.subr.mxu0 0.0
        %370 = vmatpush1.msra.mxu0 0.0
        %371 = vmatprep.subr.mxu0 0.0
        %372 = vmatpush1.msra.mxu0 0.0
        %373 = vmatprep.subr.mxu0 0.0
        %374 = vmatpush1.msra.mxu0 0.0
        %375 = vmatprep.subr.mxu0 0.0
        %376 = vmatpush1.msra.mxu0 0.0
        %377 = vmatprep.subr.mxu0 0.0
        %378 = vmatpush1.msra.mxu0 0.0
        %379 = vmatprep.subr.mxu0 0.0
        %380 = vmatpush1.msra.mxu0 0.0
        %381 = vmatprep.subr.mxu0 0.0
        %382 = vmatpush1.msra.mxu0 0.0
        %383 = vmatprep.subr.mxu0 0.0
        %384 = vmatpush1.msra.mxu0 0.0
        %385 = vmatprep.subr.mxu0 0.0
        %386 = vmatpush1.msra.mxu0 0.0
        %387 = vmatprep.subr.mxu0 0.0
        %388 = vmatpush1.msra.mxu0 0.0
        %389 = vmatprep.mubr.f32.mxu0 0.0
        %390 = vmatmul.mubr.f32.gmra.mrb[0].mxu0 %v252
        %v391 = vpop.f32.mrb[0].mxu0
        %v392 = vadd.f32 %v246, %v391
        %v393 = vpop.f32.mrb[0].mxu0
        %394 = vdwg.mxu0
        %v396 = vsel %vm250, %v321, 0
        %v399 = vsel %vm250, %v323, 0
        %401 = vmatprep.subr.mxu0 0.0
        %402 = vmatpush1.xpose.msra.mxu0 %v399
        %403 = vmatprep.subr.mxu0 0.0
        %404 = vmatpush1.xpose.msra.mxu0 0.0
        %405 = vmatprep.subr.mxu0 0.0
        %406 = vmatpush1.xpose.msra.mxu0 0.0
        %407 = vmatprep.subr.mxu0 0.0
        %408 = vmatpush1.xpose.msra.mxu0 0.0
        %409 = vmatprep.subr.mxu0 0.0
        %410 = vmatpush1.xpose.msra.mxu0 0.0
        %411 = vmatprep.subr.mxu0 0.0
        %412 = vmatpush1.xpose.msra.mxu0 0.0
        %413 = vmatprep.subr.mxu0 0.0
        %414 = vmatpush1.xpose.msra.mxu0 0.0
        %415 = vmatprep.subr.mxu0 0.0
        %416 = vmatpush1.xpose.msra.mxu0 0.0
        %417 = vmatprep.subr.mxu0 0.0
        %418 = vmatpush1.xpose.msra.mxu0 0.0
        %419 = vmatprep.subr.mxu0 0.0
        %420 = vmatpush1.xpose.msra.mxu0 0.0
        %421 = vmatprep.subr.mxu0 0.0
        %422 = vmatpush1.xpose.msra.mxu0 0.0
        %423 = vmatprep.subr.mxu0 0.0
        %424 = vmatpush1.xpose.msra.mxu0 0.0
        %425 = vmatprep.subr.mxu0 0.0
        %426 = vmatpush1.xpose.msra.mxu0 0.0
        %427 = vmatprep.subr.mxu0 0.0
        %428 = vmatpush1.xpose.msra.mxu0 0.0
        %429 = vmatprep.subr.mxu0 0.0
        %430 = vmatpush1.xpose.msra.mxu0 0.0
        %431 = vmatprep.subr.mxu0 0.0
        %432 = vmatpush1.xpose.msra.mxu0 0.0
        %433 = vmatprep.subr.mxu0 0.0
        %434 = vmatpush1.xpose.msra.mxu0 0.0
        %435 = vmatprep.subr.mxu0 0.0
        %436 = vmatpush1.xpose.msra.mxu0 0.0
        %437 = vmatprep.subr.mxu0 0.0
        %438 = vmatpush1.xpose.msra.mxu0 0.0
        %439 = vmatprep.subr.mxu0 0.0
        %440 = vmatpush1.xpose.msra.mxu0 0.0
        %441 = vmatprep.subr.mxu0 0.0
        %442 = vmatpush1.xpose.msra.mxu0 0.0
        %443 = vmatprep.subr.mxu0 0.0
        %444 = vmatpush1.xpose.msra.mxu0 0.0
        %445 = vmatprep.subr.mxu0 0.0
        %446 = vmatpush1.xpose.msra.mxu0 0.0
        %447 = vmatprep.subr.mxu0 0.0
        %448 = vmatpush1.xpose.msra.mxu0 0.0
        %449 = vmatprep.subr.mxu0 0.0
        %450 = vmatpush1.xpose.msra.mxu0 0.0
        %451 = vmatprep.subr.mxu0 0.0
        %452 = vmatpush1.xpose.msra.mxu0 0.0
        %453 = vmatprep.subr.mxu0 0.0
        %454 = vmatpush1.xpose.msra.mxu0 0.0
        %455 = vmatprep.subr.mxu0 0.0
        %456 = vmatpush1.xpose.msra.mxu0 0.0
        %457 = vmatprep.subr.mxu0 0.0
        %458 = vmatpush1.xpose.msra.mxu0 0.0
        %459 = vmatprep.subr.mxu0 0.0
        %460 = vmatpush1.xpose.msra.mxu0 0.0
        %461 = vmatprep.subr.mxu0 0.0
        %462 = vmatpush1.xpose.msra.mxu0 0.0
        %463 = vmatprep.subr.mxu0 0.0
        %464 = vmatpush1.xpose.msra.mxu0 0.0
        %465 = vmatprep.mubr.f32.mxu0 0.0
        %466 = vmatmul.mubr.f32.gmra.mrb[0].mxu0 %v396
        %v467 = vpop.f32.mrb[0].mxu0
        %v468 = vadd.f32 0.0, %v467
        %v469 = vpop.f32.mrb[0].mxu0
        %470 = vdwg.mxu0
        %vm471 = vcmask 64512
        %v472 = vsel %vm471, %v468, -inf
        %473 = vmax.xlane.f32.xlu0 %v472
        %v474 = vpop.xlane.xlu0 %473
        %v475 = vsub.f32 %v468, %v474
        %v476 = vmul.f32 %v475, 1.442695
        %v477 = vpow.pop %v476
        %v478 = vsel %vm471, %v477, 0.0
        %479 = vadd.xlane.f32.xlu0 %v478
        %v480 = vpop.xlane.xlu0 %479
        %v481 = vrcp.pop %v480
        %v482 = vmul.f32 %v477, %v481
        %v484 = vsel %vm471, %v482, 0
        %486 = vmatprep.subr.mxu0 0.0
        %487 = vmatpush1.msra.mxu0 %v392
        %488 = vmatprep.subr.mxu0 0.0
        %489 = vmatpush1.msra.mxu0 0.0
        %490 = vmatprep.subr.mxu0 0.0
        %491 = vmatpush1.msra.mxu0 0.0
        %492 = vmatprep.subr.mxu0 0.0
        %493 = vmatpush1.msra.mxu0 0.0
        %494 = vmatprep.subr.mxu0 0.0
        %495 = vmatpush1.msra.mxu0 0.0
        %496 = vmatprep.subr.mxu0 0.0
        %497 = vmatpush1.msra.mxu0 0.0
        %498 = vmatprep.subr.mxu0 0.0
        %499 = vmatpush1.msra.mxu0 0.0
        %500 = vmatprep.subr.mxu0 0.0
        %501 = vmatpush1.msra.mxu0 0.0
        %502 = vmatprep.subr.mxu0 0.0
        %503 = vmatpush1.msra.mxu0 0.0
        %504 = vmatprep.subr.mxu0 0.0
        %505 = vmatpush1.msra.mxu0 0.0
        %506 = vmatprep.subr.mxu0 0.0
        %507 = vmatpush1.msra.mxu0 0.0
        %508 = vmatprep.subr.mxu0 0.0
        %509 = vmatpush1.msra.mxu0 0.0
        %510 = vmatprep.subr.mxu0 0.0
        %511 = vmatpush1.msra.mxu0 0.0
        %512 = vmatprep.subr.mxu0 0.0
        %513 = vmatpush1.msra.mxu0 0.0
        %514 = vmatprep.subr.mxu0 0.0
        %515 = vmatpush1.msra.mxu0 0.0
        %516 = vmatprep.subr.mxu0 0.0
        %517 = vmatpush1.msra.mxu0 0.0
        %518 = vmatprep.subr.mxu0 0.0
        %519 = vmatpush1.msra.mxu0 0.0
        %520 = vmatprep.subr.mxu0 0.0
        %521 = vmatpush1.msra.mxu0 0.0
        %522 = vmatprep.subr.mxu0 0.0
        %523 = vmatpush1.msra.mxu0 0.0
        %524 = vmatprep.subr.mxu0 0.0
        %525 = vmatpush1.msra.mxu0 0.0
        %526 = vmatprep.subr.mxu0 0.0
        %527 = vmatpush1.msra.mxu0 0.0
        %528 = vmatprep.subr.mxu0 0.0
        %529 = vmatpush1.msra.mxu0 0.0
        %530 = vmatprep.subr.mxu0 0.0
        %531 = vmatpush1.msra.mxu0 0.0
        %532 = vmatprep.subr.mxu0 0.0
        %533 = vmatpush1.msra.mxu0 0.0
        %534 = vmatprep.subr.mxu0 0.0
        %535 = vmatpush1.msra.mxu0 0.0
        %536 = vmatprep.subr.mxu0 0.0
        %537 = vmatpush1.msra.mxu0 0.0
        %538 = vmatprep.subr.mxu0 0.0
        %539 = vmatpush1.msra.mxu0 0.0
        %540 = vmatprep.subr.mxu0 0.0
        %541 = vmatpush1.msra.mxu0 0.0
        %542 = vmatprep.subr.mxu0 0.0
        %543 = vmatpush1.msra.mxu0 0.0
        %544 = vmatprep.subr.mxu0 0.0
        %545 = vmatpush1.msra.mxu0 0.0
        %546 = vmatprep.subr.mxu0 0.0
        %547 = vmatpush1.msra.mxu0 0.0
        %548 = vmatprep.subr.mxu0 0.0
        %549 = vmatpush1.msra.mxu0 0.0
        %550 = vmatprep.mubr.f32.mxu0 0.0
        %551 = vmatmul.mubr.f32.gmra.mrb[0].mxu0 %v484
        %v552 = vpop.f32.mrb[0].mxu0
        %v553 = vadd.f32 0.0, %v552
        %v554 = vpop.f32.mrb[0].mxu0
        %555 = vdwg.mxu0
        %556 = vrot.lane.b32.xlu0 %v321, 96
        %v557 = vpop.permute.xlu0 %556
        %558 = vrot.lane.b32.xlu0 %v323, 96
        %v559 = vpop.permute.xlu0 %558
        %v560 = vsel %vm250, %v557, 0
        %v562 = vsel %vm250, %v559, 0
        %564 = vmatprep.subr.mxu0 0.0
        %565 = vmatpush1.xpose.msra.mxu0 %v562
        %566 = vmatprep.subr.mxu0 0.0
        %567 = vmatpush1.xpose.msra.mxu0 0.0
        %568 = vmatprep.subr.mxu0 0.0
        %569 = vmatpush1.xpose.msra.mxu0 0.0
        %570 = vmatprep.subr.mxu0 0.0
        %571 = vmatpush1.xpose.msra.mxu0 0.0
        %572 = vmatprep.subr.mxu0 0.0
        %573 = vmatpush1.xpose.msra.mxu0 0.0
        %574 = vmatprep.subr.mxu0 0.0
        %575 = vmatpush1.xpose.msra.mxu0 0.0
        %576 = vmatprep.subr.mxu0 0.0
        %577 = vmatpush1.xpose.msra.mxu0 0.0
        %578 = vmatprep.subr.mxu0 0.0
        %579 = vmatpush1.xpose.msra.mxu0 0.0
        %580 = vmatprep.subr.mxu0 0.0
        %581 = vmatpush1.xpose.msra.mxu0 0.0
        %582 = vmatprep.subr.mxu0 0.0
        %583 = vmatpush1.xpose.msra.mxu0 0.0
        %584 = vmatprep.subr.mxu0 0.0
        %585 = vmatpush1.xpose.msra.mxu0 0.0
        %586 = vmatprep.subr.mxu0 0.0
        %587 = vmatpush1.xpose.msra.mxu0 0.0
        %588 = vmatprep.subr.mxu0 0.0
        %589 = vmatpush1.xpose.msra.mxu0 0.0
        %590 = vmatprep.subr.mxu0 0.0
        %591 = vmatpush1.xpose.msra.mxu0 0.0
        %592 = vmatprep.subr.mxu0 0.0
        %593 = vmatpush1.xpose.msra.mxu0 0.0
        %594 = vmatprep.subr.mxu0 0.0
        %595 = vmatpush1.xpose.msra.mxu0 0.0
        %596 = vmatprep.subr.mxu0 0.0
        %597 = vmatpush1.xpose.msra.mxu0 0.0
        %598 = vmatprep.subr.mxu0 0.0
        %599 = vmatpush1.xpose.msra.mxu0 0.0
        %600 = vmatprep.subr.mxu0 0.0
        %601 = vmatpush1.xpose.msra.mxu0 0.0
        %602 = vmatprep.subr.mxu0 0.0
        %603 = vmatpush1.xpose.msra.mxu0 0.0
        %604 = vmatprep.subr.mxu0 0.0
        %605 = vmatpush1.xpose.msra.mxu0 0.0
        %606 = vmatprep.subr.mxu0 0.0
        %607 = vmatpush1.xpose.msra.mxu0 0.0
        %608 = vmatprep.subr.mxu0 0.0
        %609 = vmatpush1.xpose.msra.mxu0 0.0
        %610 = vmatprep.subr.mxu0 0.0
        %611 = vmatpush1.xpose.msra.mxu0 0.0
        %612 = vmatprep.subr.mxu0 0.0
        %613 = vmatpush1.xpose.msra.mxu0 0.0
        %614 = vmatprep.subr.mxu0 0.0
        %615 = vmatpush1.xpose.msra.mxu0 0.0
        %616 = vmatprep.subr.mxu0 0.0
        %617 = vmatpush1.xpose.msra.mxu0 0.0
        %618 = vmatprep.subr.mxu0 0.0
        %619 = vmatpush1.xpose.msra.mxu0 0.0
        %620 = vmatprep.subr.mxu0 0.0
        %621 = vmatpush1.xpose.msra.mxu0 0.0
        %622 = vmatprep.subr.mxu0 0.0
        %623 = vmatpush1.xpose.msra.mxu0 0.0
        %624 = vmatprep.subr.mxu0 0.0
        %625 = vmatpush1.xpose.msra.mxu0 0.0
        %626 = vmatprep.subr.mxu0 0.0
        %627 = vmatpush1.xpose.msra.mxu0 0.0
        %628 = vmatprep.mubr.f32.mxu0 0.0
        %629 = vmatmul.mubr.f32.gmra.mrb[0].mxu0 %v560
        %v630 = vpop.f32.mrb[0].mxu0
        %v631 = vadd.f32 0.0, %v630
        %v632 = vpop.f32.mrb[0].mxu0
        %633 = vdwg.mxu0
        %v634 = vsel %vm471, %v631, -inf
        %635 = vmax.xlane.f32.xlu0 %v634
        %v636 = vpop.xlane.xlu0 %635
        %v637 = vsub.f32 %v631, %v636
        %v638 = vmul.f32 %v637, 1.442695
        %v639 = vpow.pop %v638
        %v640 = vsel %vm471, %v639, 0.0
        %641 = vadd.xlane.f32.xlu0 %v640
        %v642 = vpop.xlane.xlu0 %641
        %v643 = vrcp.pop %v642
        %v644 = vmul.f32 %v639, %v643
        %646 = vrot.lane.b32.xlu0 %v392, 96
        %v647 = vpop.permute.xlu0 %646
        %v650 = vsel %vm471, %v644, 0
        %652 = vmatprep.subr.mxu0 0.0
        %653 = vmatpush1.msra.mxu0 %v647
        %654 = vmatprep.subr.mxu0 0.0
        %655 = vmatpush1.msra.mxu0 0.0
        %656 = vmatprep.subr.mxu0 0.0
        %657 = vmatpush1.msra.mxu0 0.0
        %658 = vmatprep.subr.mxu0 0.0
        %659 = vmatpush1.msra.mxu0 0.0
        %660 = vmatprep.subr.mxu0 0.0
        %661 = vmatpush1.msra.mxu0 0.0
        %662 = vmatprep.subr.mxu0 0.0
        %663 = vmatpush1.msra.mxu0 0.0
        %664 = vmatprep.subr.mxu0 0.0
        %665 = vmatpush1.msra.mxu0 0.0
        %666 = vmatprep.subr.mxu0 0.0
        %667 = vmatpush1.msra.mxu0 0.0
        %668 = vmatprep.subr.mxu0 0.0
        %669 = vmatpush1.msra.mxu0 0.0
        %670 = vmatprep.subr.mxu0 0.0
        %671 = vmatpush1.msra.mxu0 0.0
        %672 = vmatprep.subr.mxu0 0.0
        %673 = vmatpush1.msra.mxu0 0.0
        %674 = vmatprep.subr.mxu0 0.0
        %675 = vmatpush1.msra.mxu0 0.0
        %676 = vmatprep.subr.mxu0 0.0
        %677 = vmatpush1.msra.mxu0 0.0
        %678 = vmatprep.subr.mxu0 0.0
        %679 = vmatpush1.msra.mxu0 0.0
        %680 = vmatprep.subr.mxu0 0.0
        %681 = vmatpush1.msra.mxu0 0.0
        %682 = vmatprep.subr.mxu0 0.0
        %683 = vmatpush1.msra.mxu0 0.0
        %684 = vmatprep.subr.mxu0 0.0
        %685 = vmatpush1.msra.mxu0 0.0
        %686 = vmatprep.subr.mxu0 0.0
        %687 = vmatpush1.msra.mxu0 0.0
        %688 = vmatprep.subr.mxu0 0.0
        %689 = vmatpush1.msra.mxu0 0.0
        %690 = vmatprep.subr.mxu0 0.0
        %691 = vmatpush1.msra.mxu0 0.0
        %692 = vmatprep.subr.mxu0 0.0
        %693 = vmatpush1.msra.mxu0 0.0
        %694 = vmatprep.subr.mxu0 0.0
        %695 = vmatpush1.msra.mxu0 0.0
        %696 = vmatprep.subr.mxu0 0.0
        %697 = vmatpush1.msra.mxu0 0.0
        %698 = vmatprep.subr.mxu0 0.0
        %699 = vmatpush1.msra.mxu0 0.0
        %700 = vmatprep.subr.mxu0 0.0
        %701 = vmatpush1.msra.mxu0 0.0
        %702 = vmatprep.subr.mxu0 0.0
        %703 = vmatpush1.msra.mxu0 0.0
        %704 = vmatprep.subr.mxu0 0.0
        %705 = vmatpush1.msra.mxu0 0.0
        %706 = vmatprep.subr.mxu0 0.0
        %707 = vmatpush1.msra.mxu0 0.0
        %708 = vmatprep.subr.mxu0 0.0
        %709 = vmatpush1.msra.mxu0 0.0
        %710 = vmatprep.subr.mxu0 0.0
        %711 = vmatpush1.msra.mxu0 0.0
        %712 = vmatprep.subr.mxu0 0.0
        %713 = vmatpush1.msra.mxu0 0.0
        %714 = vmatprep.subr.mxu0 0.0
        %715 = vmatpush1.msra.mxu0 0.0
        %716 = vmatprep.mubr.f32.mxu0 0.0
        %717 = vmatmul.mubr.f32.gmra.mrb[0].mxu0 %v650
        %v718 = vpop.f32.mrb[0].mxu0
        %v719 = vadd.f32 0.0, %v718
        %v720 = vpop.f32.mrb[0].mxu0
        %721 = vdwg.mxu0
        %722 = vrot.lane.b32.xlu0 %v321, 64
        %v723 = vpop.permute.xlu0 %722
        %724 = vrot.lane.b32.xlu0 %v323, 64
        %v725 = vpop.permute.xlu0 %724
        %v726 = vsel %vm250, %v723, 0
        %v728 = vsel %vm250, %v725, 0
        %730 = vmatprep.subr.mxu0 0.0
        %731 = vmatpush1.xpose.msra.mxu0 %v728
        %732 = vmatprep.subr.mxu0 0.0
        %733 = vmatpush1.xpose.msra.mxu0 0.0
        %734 = vmatprep.subr.mxu0 0.0
        %735 = vmatpush1.xpose.msra.mxu0 0.0
        %736 = vmatprep.subr.mxu0 0.0
        %737 = vmatpush1.xpose.msra.mxu0 0.0
        %738 = vmatprep.subr.mxu0 0.0
        %739 = vmatpush1.xpose.msra.mxu0 0.0
        %740 = vmatprep.subr.mxu0 0.0
        %741 = vmatpush1.xpose.msra.mxu0 0.0
        %742 = vmatprep.subr.mxu0 0.0
        %743 = vmatpush1.xpose.msra.mxu0 0.0
        %744 = vmatprep.subr.mxu0 0.0
        %745 = vmatpush1.xpose.msra.mxu0 0.0
        %746 = vmatprep.subr.mxu0 0.0
        %747 = vmatpush1.xpose.msra.mxu0 0.0
        %748 = vmatprep.subr.mxu0 0.0
        %749 = vmatpush1.xpose.msra.mxu0 0.0
        %750 = vmatprep.subr.mxu0 0.0
        %751 = vmatpush1.xpose.msra.mxu0 0.0
        %752 = vmatprep.subr.mxu0 0.0
        %753 = vmatpush1.xpose.msra.mxu0 0.0
        %754 = vmatprep.subr.mxu0 0.0
        %755 = vmatpush1.xpose.msra.mxu0 0.0
        %756 = vmatprep.subr.mxu0 0.0
        %757 = vmatpush1.xpose.msra.mxu0 0.0
        %758 = vmatprep.subr.mxu0 0.0
        %759 = vmatpush1.xpose.msra.mxu0 0.0
        %760 = vmatprep.subr.mxu0 0.0
        %761 = vmatpush1.xpose.msra.mxu0 0.0
        %762 = vmatprep.subr.mxu0 0.0
        %763 = vmatpush1.xpose.msra.mxu0 0.0
        %764 = vmatprep.subr.mxu0 0.0
        %765 = vmatpush1.xpose.msra.mxu0 0.0
        %766 = vmatprep.subr.mxu0 0.0
        %767 = vmatpush1.xpose.msra.mxu0 0.0
        %768 = vmatprep.subr.mxu0 0.0
        %769 = vmatpush1.xpose.msra.mxu0 0.0
        %770 = vmatprep.subr.mxu0 0.0
        %771 = vmatpush1.xpose.msra.mxu0 0.0
        %772 = vmatprep.subr.mxu0 0.0
        %773 = vmatpush1.xpose.msra.mxu0 0.0
        %774 = vmatprep.subr.mxu0 0.0
        %775 = vmatpush1.xpose.msra.mxu0 0.0
        %776 = vmatprep.subr.mxu0 0.0
        %777 = vmatpush1.xpose.msra.mxu0 0.0
        %778 = vmatprep.subr.mxu0 0.0
        %779 = vmatpush1.xpose.msra.mxu0 0.0
        %780 = vmatprep.subr.mxu0 0.0
        %781 = vmatpush1.xpose.msra.mxu0 0.0
        %782 = vmatprep.subr.mxu0 0.0
        %783 = vmatpush1.xpose.msra.mxu0 0.0
        %784 = vmatprep.subr.mxu0 0.0
        %785 = vmatpush1.xpose.msra.mxu0 0.0
        %786 = vmatprep.subr.mxu0 0.0
        %787 = vmatpush1.xpose.msra.mxu0 0.0
        %788 = vmatprep.subr.mxu0 0.0
        %789 = vmatpush1.xpose.msra.mxu0 0.0
        %790 = vmatprep.subr.mxu0 0.0
        %791 = vmatpush1.xpose.msra.mxu0 0.0
        %792 = vmatprep.subr.mxu0 0.0
        %793 = vmatpush1.xpose.msra.mxu0 0.0
        %794 = vmatprep.mubr.f32.mxu0 0.0
        %795 = vmatmul.mubr.f32.gmra.mrb[0].mxu0 %v726
        %v796 = vpop.f32.mrb[0].mxu0
        %v797 = vadd.f32 0.0, %v796
        %v798 = vpop.f32.mrb[0].mxu0
        %799 = vdwg.mxu0
        %v800 = vsel %vm471, %v797, -inf
        %801 = vmax.xlane.f32.xlu0 %v800
        %v802 = vpop.xlane.xlu0 %801
        %v803 = vsub.f32 %v797, %v802
        %v804 = vmul.f32 %v803, 1.442695
        %v805 = vpow.pop %v804
        %v806 = vsel %vm471, %v805, 0.0
        %807 = vadd.xlane.f32.xlu0 %v806
        %v808 = vpop.xlane.xlu0 %807
        %v809 = vrcp.pop %v808
        %v810 = vmul.f32 %v805, %v809
        %811 = vrot.lane.b32.xlu0 %v392, 64
        %v812 = vpop.permute.xlu0 %811
        %v815 = vsel %vm471, %v810, 0
        %817 = vmatprep.subr.mxu0 0.0
        %818 = vmatpush1.msra.mxu0 %v812
        %819 = vmatprep.subr.mxu0 0.0
        %820 = vmatpush1.msra.mxu0 0.0
        %821 = vmatprep.subr.mxu0 0.0
        %822 = vmatpush1.msra.mxu0 0.0
        %823 = vmatprep.subr.mxu0 0.0
        %824 = vmatpush1.msra.mxu0 0.0
        %825 = vmatprep.subr.mxu0 0.0
        %826 = vmatpush1.msra.mxu0 0.0
        %827 = vmatprep.subr.mxu0 0.0
        %828 = vmatpush1.msra.mxu0 0.0
        %829 = vmatprep.subr.mxu0 0.0
        %830 = vmatpush1.msra.mxu0 0.0
        %831 = vmatprep.subr.mxu0 0.0
        %832 = vmatpush1.msra.mxu0 0.0
        %833 = vmatprep.subr.mxu0 0.0
        %834 = vmatpush1.msra.mxu0 0.0
        %835 = vmatprep.subr.mxu0 0.0
        %836 = vmatpush1.msra.mxu0 0.0
        %837 = vmatprep.subr.mxu0 0.0
        %838 = vmatpush1.msra.mxu0 0.0
        %839 = vmatprep.subr.mxu0 0.0
        %840 = vmatpush1.msra.mxu0 0.0
        %841 = vmatprep.subr.mxu0 0.0
        %842 = vmatpush1.msra.mxu0 0.0
        %843 = vmatprep.subr.mxu0 0.0
        %844 = vmatpush1.msra.mxu0 0.0
        %845 = vmatprep.subr.mxu0 0.0
        %846 = vmatpush1.msra.mxu0 0.0
        %847 = vmatprep.subr.mxu0 0.0
        %848 = vmatpush1.msra.mxu0 0.0
        %849 = vmatprep.subr.mxu0 0.0
        %850 = vmatpush1.msra.mxu0 0.0
        %851 = vmatprep.subr.mxu0 0.0
        %852 = vmatpush1.msra.mxu0 0.0
        %853 = vmatprep.subr.mxu0 0.0
        %854 = vmatpush1.msra.mxu0 0.0
        %855 = vmatprep.subr.mxu0 0.0
        %856 = vmatpush1.msra.mxu0 0.0
        %857 = vmatprep.subr.mxu0 0.0
        %858 = vmatpush1.msra.mxu0 0.0
        %859 = vmatprep.subr.mxu0 0.0
        %860 = vmatpush1.msra.mxu0 0.0
        %861 = vmatprep.subr.mxu0 0.0
        %862 = vmatpush1.msra.mxu0 0.0
        %863 = vmatprep.subr.mxu0 0.0
        %864 = vmatpush1.msra.mxu0 0.0
        %865 = vmatprep.subr.mxu0 0.0
        %866 = vmatpush1.msra.mxu0 0.0
        %867 = vmatprep.subr.mxu0 0.0
        %868 = vmatpush1.msra.mxu0 0.0
        %869 = vmatprep.subr.mxu0 0.0
        %870 = vmatpush1.msra.mxu0 0.0
        %871 = vmatprep.subr.mxu0 0.0
        %872 = vmatpush1.msra.mxu0 0.0
        %873 = vmatprep.subr.mxu0 0.0
        %874 = vmatpush1.msra.mxu0 0.0
        %875 = vmatprep.subr.mxu0 0.0
        %876 = vmatpush1.msra.mxu0 0.0
        %877 = vmatprep.subr.mxu0 0.0
        %878 = vmatpush1.msra.mxu0 0.0
        %879 = vmatprep.subr.mxu0 0.0
        %880 = vmatpush1.msra.mxu0 0.0
        %881 = vmatprep.mubr.f32.mxu0 0.0
        %882 = vmatmul.mubr.f32.gmra.mrb[0].mxu0 %v815
        %v883 = vpop.f32.mrb[0].mxu0
        %v884 = vadd.f32 0.0, %v883
        %v885 = vpop.f32.mrb[0].mxu0
        %886 = vdwg.mxu0
        %887 = vrot.lane.b32.xlu0 %v321, 32
        %v888 = vpop.permute.xlu0 %887
        %889 = vrot.lane.b32.xlu0 %v323, 32
        %v890 = vpop.permute.xlu0 %889
        %v891 = vsel %vm250, %v888, 0
        %v893 = vsel %vm250, %v890, 0
        %895 = vmatprep.subr.mxu0 0.0
        %896 = vmatpush1.xpose.msra.mxu0 %v893
        %897 = vmatprep.subr.mxu0 0.0
        %898 = vmatpush1.xpose.msra.mxu0 0.0
        %899 = vmatprep.subr.mxu0 0.0
        %900 = vmatpush1.xpose.msra.mxu0 0.0
        %901 = vmatprep.subr.mxu0 0.0
        %902 = vmatpush1.xpose.msra.mxu0 0.0
        %903 = vmatprep.subr.mxu0 0.0
        %904 = vmatpush1.xpose.msra.mxu0 0.0
        %905 = vmatprep.subr.mxu0 0.0
        %906 = vmatpush1.xpose.msra.mxu0 0.0
        %907 = vmatprep.subr.mxu0 0.0
        %908 = vmatpush1.xpose.msra.mxu0 0.0
        %909 = vmatprep.subr.mxu0 0.0
        %910 = vmatpush1.xpose.msra.mxu0 0.0
        %911 = vmatprep.subr.mxu0 0.0
        %912 = vmatpush1.xpose.msra.mxu0 0.0
        %913 = vmatprep.subr.mxu0 0.0
        %914 = vmatpush1.xpose.msra.mxu0 0.0
        %915 = vmatprep.subr.mxu0 0.0
        %916 = vmatpush1.xpose.msra.mxu0 0.0
        %917 = vmatprep.subr.mxu0 0.0
        %918 = vmatpush1.xpose.msra.mxu0 0.0
        %919 = vmatprep.subr.mxu0 0.0
        %920 = vmatpush1.xpose.msra.mxu0 0.0
        %921 = vmatprep.subr.mxu0 0.0
        %922 = vmatpush1.xpose.msra.mxu0 0.0
        %923 = vmatprep.subr.mxu0 0.0
        %924 = vmatpush1.xpose.msra.mxu0 0.0
        %925 = vmatprep.subr.mxu0 0.0
        %926 = vmatpush1.xpose.msra.mxu0 0.0
        %927 = vmatprep.subr.mxu0 0.0
        %928 = vmatpush1.xpose.msra.mxu0 0.0
        %929 = vmatprep.subr.mxu0 0.0
        %930 = vmatpush1.xpose.msra.mxu0 0.0
        %931 = vmatprep.subr.mxu0 0.0
        %932 = vmatpush1.xpose.msra.mxu0 0.0
        %933 = vmatprep.subr.mxu0 0.0
        %934 = vmatpush1.xpose.msra.mxu0 0.0
        %935 = vmatprep.subr.mxu0 0.0
        %936 = vmatpush1.xpose.msra.mxu0 0.0
        %937 = vmatprep.subr.mxu0 0.0
        %938 = vmatpush1.xpose.msra.mxu0 0.0
        %939 = vmatprep.subr.mxu0 0.0
        %940 = vmatpush1.xpose.msra.mxu0 0.0
        %941 = vmatprep.subr.mxu0 0.0
        %942 = vmatpush1.xpose.msra.mxu0 0.0
        %943 = vmatprep.subr.mxu0 0.0
        %944 = vmatpush1.xpose.msra.mxu0 0.0
        %945 = vmatprep.subr.mxu0 0.0
        %946 = vmatpush1.xpose.msra.mxu0 0.0
        %947 = vmatprep.subr.mxu0 0.0
        %948 = vmatpush1.xpose.msra.mxu0 0.0
        %949 = vmatprep.subr.mxu0 0.0
        %950 = vmatpush1.xpose.msra.mxu0 0.0
        %951 = vmatprep.subr.mxu0 0.0
        %952 = vmatpush1.xpose.msra.mxu0 0.0
        %953 = vmatprep.subr.mxu0 0.0
        %954 = vmatpush1.xpose.msra.mxu0 0.0
        %955 = vmatprep.subr.mxu0 0.0
        %956 = vmatpush1.xpose.msra.mxu0 0.0
        %957 = vmatprep.subr.mxu0 0.0
        %958 = vmatpush1.xpose.msra.mxu0 0.0
        %959 = vmatprep.mubr.f32.mxu0 0.0
        %960 = vmatmul.mubr.f32.gmra.mrb[0].mxu0 %v891
        %v961 = vpop.f32.mrb[0].mxu0
        %v962 = vadd.f32 0.0, %v961
        %v963 = vpop.f32.mrb[0].mxu0
        %964 = vdwg.mxu0
        %v965 = vsel %vm471, %v962, -inf
        %966 = vmax.xlane.f32.xlu0 %v965
        %v967 = vpop.xlane.xlu0 %966
        %v968 = vsub.f32 %v962, %v967
        %v969 = vmul.f32 %v968, 1.442695
        %v970 = vpow.pop %v969
        %v971 = vsel %vm471, %v970, 0.0
        %972 = vadd.xlane.f32.xlu0 %v971
        %v973 = vpop.xlane.xlu0 %972
        %v974 = vrcp.pop %v973
        %v975 = vmul.f32 %v970, %v974
        %976 = vrot.lane.b32.xlu0 %v392, 32
        %v977 = vpop.permute.xlu0 %976
        %v980 = vsel %vm471, %v975, 0
        %982 = vmatprep.subr.mxu0 0.0
        %983 = vmatpush1.msra.mxu0 %v977
        %984 = vmatprep.subr.mxu0 0.0
        %985 = vmatpush1.msra.mxu0 0.0
        %986 = vmatprep.subr.mxu0 0.0
        %987 = vmatpush1.msra.mxu0 0.0
        %988 = vmatprep.subr.mxu0 0.0
        %989 = vmatpush1.msra.mxu0 0.0
        %990 = vmatprep.subr.mxu0 0.0
        %991 = vmatpush1.msra.mxu0 0.0
        %992 = vmatprep.subr.mxu0 0.0
        %993 = vmatpush1.msra.mxu0 0.0
        %994 = vmatprep.subr.mxu0 0.0
        %995 = vmatpush1.msra.mxu0 0.0
        %996 = vmatprep.subr.mxu0 0.0
        %997 = vmatpush1.msra.mxu0 0.0
        %998 = vmatprep.subr.mxu0 0.0
        %999 = vmatpush1.msra.mxu0 0.0
        %1000 = vmatprep.subr.mxu0 0.0
        %1001 = vmatpush1.msra.mxu0 0.0
        %1002 = vmatprep.subr.mxu0 0.0
        %1003 = vmatpush1.msra.mxu0 0.0
        %1004 = vmatprep.subr.mxu0 0.0
        %1005 = vmatpush1.msra.mxu0 0.0
        %1006 = vmatprep.subr.mxu0 0.0
        %1007 = vmatpush1.msra.mxu0 0.0
        %1008 = vmatprep.subr.mxu0 0.0
        %1009 = vmatpush1.msra.mxu0 0.0
        %1010 = vmatprep.subr.mxu0 0.0
        %1011 = vmatpush1.msra.mxu0 0.0
        %1012 = vmatprep.subr.mxu0 0.0
        %1013 = vmatpush1.msra.mxu0 0.0
        %1014 = vmatprep.subr.mxu0 0.0
        %1015 = vmatpush1.msra.mxu0 0.0
        %1016 = vmatprep.subr.mxu0 0.0
        %1017 = vmatpush1.msra.mxu0 0.0
        %1018 = vmatprep.subr.mxu0 0.0
        %1019 = vmatpush1.msra.mxu0 0.0
        %1020 = vmatprep.subr.mxu0 0.0
        %1021 = vmatpush1.msra.mxu0 0.0
        %1022 = vmatprep.subr.mxu0 0.0
        %1023 = vmatpush1.msra.mxu0 0.0
        %1024 = vmatprep.subr.mxu0 0.0
        %1025 = vmatpush1.msra.mxu0 0.0
        %1026 = vmatprep.subr.mxu0 0.0
        %1027 = vmatpush1.msra.mxu0 0.0
        %1028 = vmatprep.subr.mxu0 0.0
        %1029 = vmatpush1.msra.mxu0 0.0
        %1030 = vmatprep.subr.mxu0 0.0
        %1031 = vmatpush1.msra.mxu0 0.0
        %1032 = vmatprep.subr.mxu0 0.0
        %1033 = vmatpush1.msra.mxu0 0.0
        %1034 = vmatprep.subr.mxu0 0.0
        %1035 = vmatpush1.msra.mxu0 0.0
        %1036 = vmatprep.subr.mxu0 0.0
        %1037 = vmatpush1.msra.mxu0 0.0
        %1038 = vmatprep.subr.mxu0 0.0
        %1039 = vmatpush1.msra.mxu0 0.0
        %1040 = vmatprep.subr.mxu0 0.0
        %1041 = vmatpush1.msra.mxu0 0.0
        %1042 = vmatprep.subr.mxu0 0.0
        %1043 = vmatpush1.msra.mxu0 0.0
        %1044 = vmatprep.subr.mxu0 0.0
        %1045 = vmatpush1.msra.mxu0 0.0
        %1046 = vmatprep.mubr.f32.mxu0 0.0
        %1047 = vmatmul.mubr.f32.gmra.mrb[0].mxu0 %v980
        %v1048 = vpop.f32.mrb[0].mxu0
        %v1049 = vadd.f32 0.0, %v1048
        %v1050 = vpop.f32.mrb[0].mxu0
        %1051 = vdwg.mxu0
        %1053 = vrot.lane.b32.xlu0 %v719, 32
        %v1054 = vpop.permute.xlu0 %1053
        %1057 = vrot.lane.b32.xlu0 %v884, 64
        %v1058 = vpop.permute.xlu0 %1057
        %1061 = vrot.lane.b32.xlu0 %v1049, 96
        %v1062 = vpop.permute.xlu0 %1061
        %v1064 = vsel %vm250, %v553, %v1054
        %vm1065 = vcmask 523264
        %v1066 = vsel %vm1065, %v1064, %v1058
        %vm1067 = vcmask 785408
        %v1068 = vsel %vm1067, %v1066, %v1062
        %v1069 = vld [vmem:[%s3] sm:$0xff]
        %v1070 = vld [vmem:[%s3 + $0x8] sm:$0xff]
        %v1071 = vld [vmem:[%s3 + $0x10] sm:$0xff]
        %v1072 = vld [vmem:[%s3 + $0x18] sm:$0xff]
        %v1073 = vld [vmem:[%s3 + $0x20] sm:$0xff]
        %v1074 = vld [vmem:[%s3 + $0x28] sm:$0xff]
        %v1075 = vld [vmem:[%s3 + $0x30] sm:$0xff]
        %v1076 = vld [vmem:[%s3 + $0x38] sm:$0xff]
        %v1077 = vld [vmem:[%s3 + $0x40] sm:$0xff]
        %v1078 = vld [vmem:[%s3 + $0x48] sm:$0xff]
        %v1079 = vld [vmem:[%s3 + $0x50] sm:$0xff]
        %v1080 = vld [vmem:[%s3 + $0x58] sm:$0xff]
        %v1081 = vld [vmem:[%s3 + $0x60] sm:$0xff]
        %v1082 = vld [vmem:[%s3 + $0x68] sm:$0xff]
        %v1083 = vld [vmem:[%s3 + $0x70] sm:$0xff]
        %v1084 = vld [vmem:[%s3 + $0x78] sm:$0xff]
        %v1085 = vld [vmem:[%s4] sm:$0x1]
        %v1087 = vlaneseq
        %v1088 = vshrl.u32 %v1087, 7
        %v1089 = vsub.s32 0, %v1088
        %v1090 = vrot.slane %v1085, %v1089
        %1092 = vmatprep.subr.mxu0 0.0
        %1093 = vmatpush1.msra.mxu0 %v1069
        %1094 = vmatprep.subr.mxu0 0.0
        %1095 = vmatpush1.msra.mxu0 %v1070
        %1096 = vmatprep.subr.mxu0 0.0
        %1097 = vmatpush1.msra.mxu0 %v1071
        %1098 = vmatprep.subr.mxu0 0.0
        %1099 = vmatpush1.msra.mxu0 %v1072
        %1100 = vmatprep.subr.mxu0 0.0
        %1101 = vmatpush1.msra.mxu0 %v1073
        %1102 = vmatprep.subr.mxu0 0.0
        %1103 = vmatpush1.msra.mxu0 %v1074
        %1104 = vmatprep.subr.mxu0 0.0
        %1105 = vmatpush1.msra.mxu0 %v1075
        %1106 = vmatprep.subr.mxu0 0.0
        %1107 = vmatpush1.msra.mxu0 %v1076
        %1108 = vmatprep.subr.mxu0 0.0
        %1109 = vmatpush1.msra.mxu0 %v1077
        %1110 = vmatprep.subr.mxu0 0.0
        %1111 = vmatpush1.msra.mxu0 %v1078
        %1112 = vmatprep.subr.mxu0 0.0
        %1113 = vmatpush1.msra.mxu0 %v1079
        %1114 = vmatprep.subr.mxu0 0.0
        %1115 = vmatpush1.msra.mxu0 %v1080
        %1116 = vmatprep.subr.mxu0 0.0
        %1117 = vmatpush1.msra.mxu0 %v1081
        %1118 = vmatprep.subr.mxu0 0.0
        %1119 = vmatpush1.msra.mxu0 %v1082
        %1120 = vmatprep.subr.mxu0 0.0
        %1121 = vmatpush1.msra.mxu0 %v1083
        %1122 = vmatprep.subr.mxu0 0.0
        %1123 = vmatpush1.msra.mxu0 %v1084
        %1124 = vmatprep.subr.mxu0 0.0
        %1125 = vmatpush1.msra.mxu0 0.0
        %1126 = vmatprep.subr.mxu0 0.0
        %1127 = vmatpush1.msra.mxu0 0.0
        %1128 = vmatprep.subr.mxu0 0.0
        %1129 = vmatpush1.msra.mxu0 0.0
        %1130 = vmatprep.subr.mxu0 0.0
        %1131 = vmatpush1.msra.mxu0 0.0
        %1132 = vmatprep.subr.mxu0 0.0
        %1133 = vmatpush1.msra.mxu0 0.0
        %1134 = vmatprep.subr.mxu0 0.0
        %1135 = vmatpush1.msra.mxu0 0.0
        %1136 = vmatprep.subr.mxu0 0.0
        %1137 = vmatpush1.msra.mxu0 0.0
        %1138 = vmatprep.subr.mxu0 0.0
        %1139 = vmatpush1.msra.mxu0 0.0
        %1140 = vmatprep.subr.mxu0 0.0
        %1141 = vmatpush1.msra.mxu0 0.0
        %1142 = vmatprep.subr.mxu0 0.0
        %1143 = vmatpush1.msra.mxu0 0.0
        %1144 = vmatprep.subr.mxu0 0.0
        %1145 = vmatpush1.msra.mxu0 0.0
        %1146 = vmatprep.subr.mxu0 0.0
        %1147 = vmatpush1.msra.mxu0 0.0
        %1148 = vmatprep.subr.mxu0 0.0
        %1149 = vmatpush1.msra.mxu0 0.0
        %1150 = vmatprep.subr.mxu0 0.0
        %1151 = vmatpush1.msra.mxu0 0.0
        %1152 = vmatprep.subr.mxu0 0.0
        %1153 = vmatpush1.msra.mxu0 0.0
        %1154 = vmatprep.subr.mxu0 0.0
        %1155 = vmatpush1.msra.mxu0 0.0
        %1156 = vmatprep.mubr.f32.mxu0 0.0
        %1157 = vmatmul.mubr.f32.gmra.mrb[0].mxu0 %v1068
        %v1158 = vpop.f32.mrb[0].mxu0
        %v1159 = vadd.f32 %v1090, %v1158
        %v1160 = vpop.f32.mrb[0].mxu0
        %1161 = vdwg.mxu0
        %1162 = vst.msk [vmem:[%s215] sm:$0xff] %vm250, %v1159
        %s1163 = sand.u32 %s137, 1
        %s1164 = scalar_lea.sflag [#allocation3], %s1163
        %s1165 = sand.u32 %s137, 1
        %s1166 = smul.addr %s1165, 8
        %s1167 = scalar_lea.vmem [#allocation2], %s1166
        // Predicated region
        $region41: #{tpu_custom_call.1} parent=39 // pred_check
          %p1168 = pneg %p147
        $region42: #{tpu_custom_call.1} parent=39 // pred_check_branch
          %1170 = sbr.rel (%p1168) target = $region44
        $region43: #{tpu_custom_call.1} parent=39 // pred_region
          %s1172 = ssub.s32 128, 128
          %1173 = vsyncadd %s1164, %s1172
          %s1174 = smul.addr %s19, 128
          %s1175 = scalar_lea.hbm %s5, %s1174
          %s1177 = sshll.u32 %s1167, 4
          %s1178 = int_to_ptr.vmem [resolvable:$true] %s1177
          %1180 = dma.vmem_to_hbm [thread:$0]  %s1178, 128, %s1175, %s1164
        $region44: #{tpu_custom_call.1} parent=39 // pred_fallthru
          _
      $region40: #{tpu_custom_call.1} parent=5 // pred_fallthru
        _
      %p1181 = scmp.le.s32.totalorder 2, %s14
      // Predicated region
      $region45: #{tpu_custom_call.1} parent=5 // pred_check
        %p1182 = pneg %p1181
      $region46: #{tpu_custom_call.1} parent=5 // pred_check_branch
        %1184 = sbr.rel (%p1182) target = $region48
      $region47: #{tpu_custom_call.1} parent=5 // pred_region
        %s1185 = ssub.s32 %s14, 2
        // Predicated region
        $region49: #{tpu_custom_call.1} parent=47 // pred_check
          %p1186 = pneg %p153
        $region50: #{tpu_custom_call.1} parent=47 // pred_check_branch
          %1188 = sbr.rel (%p1186) target = $region52
        $region51: #{tpu_custom_call.1} parent=47 // pred_region
          %s1189 = sand.u32 %s138, 1
          %s1190 = scalar_lea.sflag [#allocation3], %s1189
          %s1191 = sand.u32 %s138, 1
          %s1192 = smul.addr %s1191, 8
          %s1193 = scalar_lea.vmem [#allocation2], %s1192
          %1194 = dma.done %s1190, 128
        $region52: #{tpu_custom_call.1} parent=47 // pred_fallthru
          _
      $region48: #{tpu_custom_call.1} parent=5 // pred_fallthru
        _
    $region6: #{tpu_custom_call.1} parent=1 // loop_footer
      %s18 = sadd.s32 1, %s14
    $region7: #{tpu_custom_call.1} parent=1 // loop_footer_branch
      %13 = sbr.rel target = $region3
    $region8: #{tpu_custom_call.1} parent=1 // loop_exit
      _
    %1195 = vsyncpa [#allocation3], 1
    %s1196 = scalar_lea.sflag [#allocation3], 1
    %1197 = vsyncpa %s1196, 1

</llo_original>
